<compile_context>
chip_gen: v6e
topology: v6e:2x2x1
jax: 0.10.0
libtpu: 0.0.40
codegen_flags: <defaults>
</compile_context>

<pallas_src>
import functools

import jax
import jax.numpy as jnp
import numpy as np
from jax.experimental import pallas as pl
from jax.experimental.pallas import tpu as pltpu

_LANE = 128
_SUBLANE = 8


def _dice_sums_kernel(x_ref, t_ref, out_ref, *, s_total, ts_rows, need_mask):
    """Accumulates sum(p*t), sum(p*p), sum(t*t) for one batch element.

    x_ref, t_ref : (1, N, ts_rows, 128) tiles of logits / targets (native dtype).
    out_ref      : (1, 3, N, 128) f32 partial sums; same block index for every
                   spatial step, so it stays resident in VMEM and is used
                   directly as the accumulator.  The final (tiny) lane collapse
                   to (B, 3, N) happens in the wrapper.
    """
    s = pl.program_id(1)  # spatial (row-tile) index; batch is grid axis 0

    @pl.when(s == 0)
    def _():
        out_ref[...] = jnp.zeros(out_ref.shape, out_ref.dtype)

    x = x_ref[0].astype(jnp.float32)   # (N, ts_rows, 128)
    t = t_ref[0].astype(jnp.float32)   # (N, ts_rows, 128)

    def accumulate(xv, tv, p_mask=None):
        # torch.softmax(input, dim=1): the class axis is the outermost tile
        # axis -> pure element-wise vreg max/add on the VPU (no XLU reduce).
        m = jnp.max(xv, axis=0, keepdims=True)
        e = jnp.exp(xv - m)
        # One reciprocal per spatial column (not per element), then multiply.
        inv = pl.reciprocal(jnp.sum(e, axis=0, keepdims=True), approx=False)
        p = e * inv
        if p_mask is not None:
            p = p * p_mask                      # kill softmax of padded columns
        # Per-step partial reduction over the rows (sublane) axis only; the
        # accumulator is a tiny lane-dense (N, 128) slab per sum.
        out_ref[0, 0] += jnp.sum(p * tv, axis=1)
        out_ref[0, 1] += jnp.sum(p * p, axis=1)
        out_ref[0, 2] += jnp.sum(tv * tv, axis=1)

    if need_mask:
        # Only the tile that reaches flat index >= s_total needs masking.
        is_tail = (s + 1) * (ts_rows * _LANE) > s_total

        @pl.when(jnp.logical_not(is_tail))
        def _():
            accumulate(x, t)

        @pl.when(is_tail)
        def _():
            row = jax.lax.broadcasted_iota(jnp.int32, x.shape, 1) + s * ts_rows
            lane = jax.lax.broadcasted_iota(jnp.int32, x.shape, 2)
            # Compare in (row, lane) pieces to avoid int32 overflow for huge S.
            full_rows = s_total // _LANE
            rem = s_total % _LANE
            valid = (row < full_rows) | ((row == full_rows) & (lane < rem))
            # Mask logits/targets BEFORE the exp: rows past the array extent may
            # hold garbage; padded columns hold zeros (softmax would give 1/N).
            xm = jnp.where(valid, x, 0.0)
            tm = jnp.where(valid, t, 0.0)
            accumulate(xm, tm, p_mask=valid.astype(jnp.float32))
    else:
        accumulate(x, t)


def _vmem_capacity_bytes(default=64 * 1024 * 1024):
    """Generation-aware VMEM capacity (64 MiB/TC on v7x, 128 MiB v5e/v6e)."""
    try:
        cap = getattr(pltpu.get_tpu_info(), "vmem_capacity_bytes", None)
        if cap:
            return int(cap)
    except Exception:
        pass
    return default  # conservative (v7x per-TensorCore) fallback


def dice_loss_with_softmax_3d(inp, tgt, eps=1e-6, *, max_rows_per_step=None):
    """Pallas implementation of DiceLossWithSoftmax3D.forward."""
    if inp.ndim != 5:
        raise ValueError(f"Invalid input shape, we expect BxNxDxHxW. Got: {inp.shape}")
    if inp.shape[-3:] != tgt.shape[-3:]:
        raise ValueError(
            f"input and target shapes must be the same. Got: {inp.shape} {tgt.shape}")
    if tgt.shape != inp.shape:
        raise ValueError(f"target must have shape {inp.shape}, got {tgt.shape}")

    B, N, D, H, W = inp.shape
    S = D * H * W

    x_bytes = jnp.dtype(inp.dtype).itemsize
    t_bytes = jnp.dtype(tgt.dtype).itemsize
    # Sublane-packing granule of the most-packed streamed dtype
    # (8 rows for f32, 16 for bf16, 32 for int8/fp8).
    min_item = max(1, min(x_bytes, t_bytes))
    row_align = _SUBLANE * max(1, 4 // min_item)

    # Re-layout: (B, N, S) -> (B, N, R, 128).  Pad S up to the packing granule;
    # for typical 3-D volumes S is already aligned and this is a free reshape.
    pad_unit = row_align * _LANE
    s_pad = -(-S // pad_unit) * pad_unit
    x = inp.reshape(B, N, S)
    t = tgt.reshape(B, N, S)
    if s_pad != S:
        x = jnp.pad(x, ((0, 0), (0, 0), (0, s_pad - S)))
        t = jnp.pad(t, ((0, 0), (0, 0), (0, s_pad - S)))
    R = s_pad // _LANE
    x = x.reshape(B, N, R, _LANE)
    t = t.reshape(B, N, R, _LANE)

    bytes_per_row = N * _LANE * (x_bytes + t_bytes)   # HBM bytes per 128-wide row
    f32_row = N * _LANE * 4                           # one f32 temp row

    vmem_cap = _vmem_capacity_bytes()
    vmem_limit = min(96 * 1024 * 1024, (vmem_cap // 8) * 7)   # ~56 MiB on v7x

    # Spatial tile: target ~4 MiB of HBM traffic per grid step (>> the ~0.35 us
    # per-step overhead), capped so the double-buffered inputs plus in-kernel
    # f32 temporaries stay well inside the VMEM limit.
    target_step_bytes = 4 * 1024 * 1024
    vmem_per_row = 2 * bytes_per_row + 6 * f32_row
    rows = target_step_bytes // bytes_per_row
    rows = min(rows, (vmem_limit * 2 // 3) // max(1, vmem_per_row))
    if max_rows_per_step is not None:
        rows = min(rows, int(max_rows_per_step))
    rows = max(rows, row_align)
    rows = min(rows, R)
    ts_rows = max(row_align, (rows // row_align) * row_align)

    num_row_tiles = (R + ts_rows - 1) // ts_rows
    # Static: does any step touch flat indices >= S (pad columns / rows past R)?
    need_mask = (num_row_tiles * ts_rows * _LANE) != S

    kernel = functools.partial(
        _dice_sums_kernel, s_total=S, ts_rows=ts_rows, need_mask=need_mask)

    in_map = lambda b, s: (b, 0, s, 0)
    sums = pl.pallas_call(
        kernel,
        grid=(B, num_row_tiles),
        in_specs=[
            pl.BlockSpec((1, N, ts_rows, _LANE), in_map),
            pl.BlockSpec((1, N, ts_rows, _LANE), in_map),
        ],
        out_specs=pl.BlockSpec((1, 3, N, _LANE), lambda b, s: (b, 0, 0, 0)),
        out_shape=jax.ShapeDtypeStruct((B, 3, N, _LANE), jnp.float32),
        compiler_params=pltpu.CompilerParams(
            dimension_semantics=("parallel", "arbitrary"),
            vmem_limit_bytes=int(vmem_limit),
        ),
    )(x, t)

    sums = jnp.sum(sums, axis=-1)                 # (B, 3, N): tiny lane collapse
    inter, p2, t2 = sums[:, 0], sums[:, 1], sums[:, 2]
    # TODO(synk): the PyTorch reference applies an extra torch.sum(..., dims=(2,3,4))
    # to an already-(B,N) tensor, which raises IndexError; we use the intended
    # standard dice cardinality = sum(p^2) + sum(t^2).
    cardinality = p2 + t2
    dice_score = 2.0 * inter / (cardinality + eps)
    return jnp.mean(1.0 - dice_score)


def _reference(inp, tgt, eps=1e-6):
    p = jax.nn.softmax(inp.astype(jnp.float32), axis=1)
    tgt = tgt.astype(jnp.float32)
    dims = (2, 3, 4)
    inter = jnp.sum(p * tgt, axis=dims)
    card = jnp.sum(p * p, axis=dims) + jnp.sum(tgt * tgt, axis=dims)
    dice = 2.0 * inter / (card + eps)
    return jnp.mean(1.0 - dice)


if __name__ == "__main__":
    key = jax.random.PRNGKey(0)
    k1, k2, k3, k4, k5, k6 = jax.random.split(key, 6)

    # Test 1: f32 inputs, S = 8*8*16 = 1024 (lane/sublane aligned):
    # single unmasked tile per batch element, clean fast path.
    B, N, D, H, W = 2, 4, 8, 8, 16
    logits = jax.random.normal(k1, (B, N, D, H, W), dtype=jnp.float32)
    labels = jax.random.randint(k2, (B, D, H, W), 0, N)
    target = jnp.transpose(
        jax.nn.one_hot(labels, N, dtype=jnp.float32), (0, 4, 1, 2, 3))
    loss = jax.block_until_ready(dice_loss_with_softmax_3d(logits, target))
    ref = jax.block_until_ready(_reference(logits, target))
    np.testing.assert_allclose(np.asarray(loss), np.asarray(ref),
                               rtol=1e-5, atol=1e-6)

    # Test 2: bf16 inputs (native-dtype streaming), ragged S = 10*20*31 = 6200,
    # forced small tile (48 rows) -> multi-tile path with a tail tile covering
    # both zero-padded columns and rows past the array extent (masked).
    B2, N2, D2, H2, W2 = 2, 3, 10, 20, 31
    logits2 = jax.random.normal(
        k3, (B2, N2, D2, H2, W2), dtype=jnp.float32).astype(jnp.bfloat16)
    labels2 = jax.random.randint(k4, (B2, D2, H2, W2), 0, N2)
    target2 = jnp.transpose(
        jax.nn.one_hot(labels2, N2, dtype=jnp.bfloat16), (0, 4, 1, 2, 3))
    loss2 = jax.block_until_ready(
        dice_loss_with_softmax_3d(logits2, target2, max_rows_per_step=48))
    ref2 = jax.block_until_ready(_reference(logits2, target2))
    np.testing.assert_allclose(np.asarray(loss2), np.asarray(ref2),
                               rtol=1e-5, atol=1e-6)

    # Test 3: tiny spatial size S = 2*3*7 = 42 (< one tile row-group) and B = 1:
    # single tile where almost everything is masked padding.
    B3, N3, D3, H3, W3 = 1, 3, 2, 3, 7
    logits3 = jax.random.normal(k5, (B3, N3, D3, H3, W3), dtype=jnp.float32)
    labels3 = jax.random.randint(k6, (B3, D3, H3, W3), 0, N3)
    target3 = jnp.transpose(
        jax.nn.one_hot(labels3, N3, dtype=jnp.float32), (0, 4, 1, 2, 3))
    loss3 = jax.block_until_ready(dice_loss_with_softmax_3d(logits3, target3))
    ref3 = jax.block_until_ready(_reference(logits3, target3))
    np.testing.assert_allclose(np.asarray(loss3), np.asarray(ref3),
                               rtol=1e-5, atol=1e-6)

    print("KERNEL_OK")
</pallas_src>

<mosaic_0001>
module attributes {stable_mosaic.version = 11 : i64} {
  func.func @_dice_sums_kernel(%arg0: i32, %arg1: i32, %arg2: memref<1x4x8x128xf32, #tpu.memory_space<vmem>>, %arg3: memref<1x4x8x128xf32, #tpu.memory_space<vmem>>, %arg4: memref<1x3x4x128xf32, #tpu.memory_space<vmem>>) attributes {dimension_semantics = [#tpu.dimension_semantics<parallel>, #tpu.dimension_semantics<arbitrary>], iteration_bounds = array<i64: 2, 1>, scalar_prefetch = 0 : i64, scratch_operands = 0 : i64, tpu.core_type = #tpu.core_type<tc>, window_params = [{transform_indices = @transform_0, window_bounds = array<i64: 1, 4, 8, 128>}, {transform_indices = @transform_1, window_bounds = array<i64: 1, 4, 8, 128>}, {transform_indices = @transform_2, window_bounds = array<i64: 1, 3, 4, 128>}]} {
    %c0_i32 = arith.constant 0 : i32
    %0 = arith.cmpi eq, %arg1, %c0_i32 : i32
    %1 = arith.extui %0 : i1 to i32
    %c0_i32_0 = arith.constant 0 : i32
    %2 = arith.cmpi ne, %1, %c0_i32_0 : i32
    scf.if %2 {
      %cst_34 = arith.constant 0.000000e+00 : f32
      %41 = vector.broadcast %cst_34 : f32 to vector<1x3x4x128xf32>
      %c0_35 = arith.constant 0 : index
      %c0_36 = arith.constant 0 : index
      %c0_37 = arith.constant 0 : index
      %c0_38 = arith.constant 0 : index
      %42 = vector.load %arg4[%c0_35, %c0_36, %c0_37, %c0_38] : memref<1x3x4x128xf32, #tpu.memory_space<vmem>>, vector<1x3x4x128xf32>
      tpu.vector_store %arg4[%c0_35, %c0_36, %c0_37, %c0_38], %41 {strides = array<i32>} : memref<1x3x4x128xf32, #tpu.memory_space<vmem>>, vector<1x3x4x128xf32>,
    } else {
    }
    %c0 = arith.constant 0 : index
    %c0_1 = arith.constant 0 : index
    %c0_2 = arith.constant 0 : index
    %c0_3 = arith.constant 0 : index
    %3 = vector.load %arg2[%c0, %c0_1, %c0_2, %c0_3] : memref<1x4x8x128xf32, #tpu.memory_space<vmem>>, vector<1x4x8x128xf32>
    %4 = vector.shape_cast %3 : vector<1x4x8x128xf32> to vector<4x8x128xf32>
    %c0_4 = arith.constant 0 : index
    %c0_5 = arith.constant 0 : index
    %c0_6 = arith.constant 0 : index
    %c0_7 = arith.constant 0 : index
    %5 = vector.load %arg3[%c0_4, %c0_5, %c0_6, %c0_7] : memref<1x4x8x128xf32, #tpu.memory_space<vmem>>, vector<1x4x8x128xf32>
    %6 = vector.shape_cast %5 : vector<1x4x8x128xf32> to vector<4x8x128xf32>
    %cst = arith.constant dense<0xFF800000> : vector<8x128xf32>
    %7 = vector.multi_reduction <maximumf>, %4, %cst [0] : vector<4x8x128xf32> to vector<8x128xf32>
    %8 = vector.shape_cast %7 : vector<8x128xf32> to vector<1x8x128xf32>
    %9 = vector.broadcast %8 : vector<1x8x128xf32> to vector<4x8x128xf32>
    %10 = arith.subf %4, %9 : vector<4x8x128xf32>
    %11 = math.exp %10 : vector<4x8x128xf32>
    %cst_8 = arith.constant dense<0.000000e+00> : vector<8x128xf32>
    %12 = vector.multi_reduction <add>, %11, %cst_8 [0] : vector<4x8x128xf32> to vector<8x128xf32>
    %13 = vector.shape_cast %12 : vector<8x128xf32> to vector<1x8x128xf32>
    %14 = tpu.reciprocal %13 : vector<1x8x128xf32> -> vector<1x8x128xf32>
    %15 = vector.broadcast %14 : vector<1x8x128xf32> to vector<4x8x128xf32>
    %16 = arith.mulf %11, %15 : vector<4x8x128xf32>
    %c0_9 = arith.constant 0 : index
    %c0_10 = arith.constant 0 : index
    %c0_11 = arith.constant 0 : index
    %c0_12 = arith.constant 0 : index
    %17 = vector.load %arg4[%c0_9, %c0_10, %c0_11, %c0_12] : memref<1x3x4x128xf32, #tpu.memory_space<vmem>>, vector<1x1x4x128xf32>
    %18 = vector.shape_cast %17 : vector<1x1x4x128xf32> to vector<4x128xf32>
    %19 = arith.mulf %16, %6 : vector<4x8x128xf32>
    %cst_13 = arith.constant dense<0.000000e+00> : vector<4x128xf32>
    %20 = vector.multi_reduction <add>, %19, %cst_13 [1] : vector<4x8x128xf32> to vector<4x128xf32>
    %21 = arith.addf %18, %20 : vector<4x128xf32>
    %c0_14 = arith.constant 0 : index
    %c0_15 = arith.constant 0 : index
    %c0_16 = arith.constant 0 : index
    %c0_17 = arith.constant 0 : index
    %22 = vector.load %arg4[%c0_14, %c0_15, %c0_16, %c0_17] : memref<1x3x4x128xf32, #tpu.memory_space<vmem>>, vector<1x1x4x128xf32>
    %23 = vector.shape_cast %22 : vector<1x1x4x128xf32> to vector<4x128xf32>
    %24 = vector.shape_cast %21 : vector<4x128xf32> to vector<1x1x4x128xf32>
    tpu.vector_store %arg4[%c0_14, %c0_15, %c0_16, %c0_17], %24 {strides = array<i32>} : memref<1x3x4x128xf32, #tpu.memory_space<vmem>>, vector<1x1x4x128xf32>,
    %c0_18 = arith.constant 0 : index
    %c1 = arith.constant 1 : index
    %c0_19 = arith.constant 0 : index
    %c0_20 = arith.constant 0 : index
    %25 = vector.load %arg4[%c0_18, %c1, %c0_19, %c0_20] : memref<1x3x4x128xf32, #tpu.memory_space<vmem>>, vector<1x1x4x128xf32>
    %26 = vector.shape_cast %25 : vector<1x1x4x128xf32> to vector<4x128xf32>
    %27 = arith.mulf %16, %16 : vector<4x8x128xf32>
    %cst_21 = arith.constant dense<0.000000e+00> : vector<4x128xf32>
    %28 = vector.multi_reduction <add>, %27, %cst_21 [1] : vector<4x8x128xf32> to vector<4x128xf32>
    %29 = arith.addf %26, %28 : vector<4x128xf32>
    %c0_22 = arith.constant 0 : index
    %c1_23 = arith.constant 1 : index
    %c0_24 = arith.constant 0 : index
    %c0_25 = arith.constant 0 : index
    %30 = vector.load %arg4[%c0_22, %c1_23, %c0_24, %c0_25] : memref<1x3x4x128xf32, #tpu.memory_space<vmem>>, vector<1x1x4x128xf32>
    %31 = vector.shape_cast %30 : vector<1x1x4x128xf32> to vector<4x128xf32>
    %32 = vector.shape_cast %29 : vector<4x128xf32> to vector<1x1x4x128xf32>
    tpu.vector_store %arg4[%c0_22, %c1_23, %c0_24, %c0_25], %32 {strides = array<i32>} : memref<1x3x4x128xf32, #tpu.memory_space<vmem>>, vector<1x1x4x128xf32>,
    %c0_26 = arith.constant 0 : index
    %c2 = arith.constant 2 : index
    %c0_27 = arith.constant 0 : index
    %c0_28 = arith.constant 0 : index
    %33 = vector.load %arg4[%c0_26, %c2, %c0_27, %c0_28] : memref<1x3x4x128xf32, #tpu.memory_space<vmem>>, vector<1x1x4x128xf32>
    %34 = vector.shape_cast %33 : vector<1x1x4x128xf32> to vector<4x128xf32>
    %35 = arith.mulf %6, %6 : vector<4x8x128xf32>
    %cst_29 = arith.constant dense<0.000000e+00> : vector<4x128xf32>
    %36 = vector.multi_reduction <add>, %35, %cst_29 [1] : vector<4x8x128xf32> to vector<4x128xf32>
    %37 = arith.addf %34, %36 : vector<4x128xf32>
    %c0_30 = arith.constant 0 : index
    %c2_31 = arith.constant 2 : index
    %c0_32 = arith.constant 0 : index
    %c0_33 = arith.constant 0 : index
    %38 = vector.load %arg4[%c0_30, %c2_31, %c0_32, %c0_33] : memref<1x3x4x128xf32, #tpu.memory_space<vmem>>, vector<1x1x4x128xf32>
    %39 = vector.shape_cast %38 : vector<1x1x4x128xf32> to vector<4x128xf32>
    %40 = vector.shape_cast %37 : vector<4x128xf32> to vector<1x1x4x128xf32>
    tpu.vector_store %arg4[%c0_30, %c2_31, %c0_32, %c0_33], %40 {strides = array<i32>} : memref<1x3x4x128xf32, #tpu.memory_space<vmem>>, vector<1x1x4x128xf32>,
    return
  }
  func.func @transform_0(%arg0: i32, %arg1: i32) -> (i32, i32, i32, i32) {
    %c0_i32 = arith.constant 0 : i32
    %c0_i32_0 = arith.constant 0 : i32
    %c0_i32_1 = arith.constant 0 : i32
    return %arg0, %c0_i32, %arg1, %c0_i32_0 : i32, i32, i32, i32
  }
  func.func @transform_1(%arg0: i32, %arg1: i32) -> (i32, i32, i32, i32) {
    %c0_i32 = arith.constant 0 : i32
    %c0_i32_0 = arith.constant 0 : i32
    %c0_i32_1 = arith.constant 0 : i32
    return %arg0, %c0_i32, %arg1, %c0_i32_0 : i32, i32, i32, i32
  }
  func.func @transform_2(%arg0: i32, %arg1: i32) -> (i32, i32, i32, i32) {
    %c0_i32 = arith.constant 0 : i32
    %c0_i32_0 = arith.constant 0 : i32
    %c0_i32_1 = arith.constant 0 : i32
    %c0_i32_2 = arith.constant 0 : i32
    return %arg0, %c0_i32, %c0_i32_0, %c0_i32_1 : i32, i32, i32, i32
  }
}

</mosaic_0001>

<llo_original>
// kernel: tpu_custom_call.1
$region0: #{tpu_custom_call.1}
  #allocation0 [shape = 'u32[]', space=smem, size = 0x4, offset = 0x4, fixed_abs, tag = 'smem constant byte address 0x4 - core index']
  #allocation1 [shape = 'u32[144,128]{1,0:T(1,128)}', space=vmem, size = 0x12000, scoped, tag = 'internal scratch']
  %s0 = inlined_call_operand.hbm [shape: f32[2,4,8,128], index: 0, kind: input, shape index: {}]
  %s1 = inlined_call_operand.hbm [shape: f32[2,4,8,128], index: 1, kind: input, shape index: {}]
  %s2 = inlined_call_operand.hbm [shape: f32[2,3,4,128], index: 2, kind: output, shape index: {}]
  %s3 = sld [smem:[#allocation0]]
  $region53: #{tpu_custom_call.1} parent=0
    _
  %s5 = ssub.s32 1, %s3
  %s6 = scalar_select 0, %s5, %s3
  $region1: #{tpu_custom_call.1} parent=0
    #allocation2 [shape = 'u8[32768]{0}', space=vmem, size = 0x8000, scoped, tag = 'input window, operand 0']
    #allocation3 [shape = 's32[2]{0}', space=sflag, size = 0x8, scoped, tag = 'scoped memory for tpu_custom_call.1']
    #allocation4 [shape = 's32[2]{0}', space=sflag, size = 0x8, scoped, tag = 'scoped memory for tpu_custom_call.1']
    #allocation5 [shape = 'u8[32768]{0}', space=vmem, size = 0x8000, scoped, tag = 'input window, operand 1']
    #allocation6 [shape = 's32[2]{0}', space=sflag, size = 0x8, scoped, tag = 'scoped memory for tpu_custom_call.1']
    #allocation7 [shape = 'u8[12288]{0}', space=vmem, size = 0x3000, scoped, tag = 'output window, operand 0']
    %7 = vsyncpa [#allocation3], 0
    %s8 = scalar_lea.sflag [#allocation3], 1
    %9 = vsyncpa %s8, 0
    %10 = vsyncpa [#allocation6], 0
    %s11 = scalar_lea.sflag [#allocation6], 1
    %12 = vsyncpa %s11, 0
    %13 = vsyncpa [#allocation4], 0
    %s14 = scalar_lea.sflag [#allocation4], 1
    %15 = vsyncpa %s14, 0
    loop: start=0, step=1, limit=4
    $region2: #{tpu_custom_call.1} parent=1 // loop_pre_header
      _
    $region3: #{tpu_custom_call.1} parent=1 // loop_header
      %s17 = sphi 0, %s21
      %p18 = scmp.ge.s32.totalorder %s17, 4
      %s24 = sphi 0, %s36
      %s25 = sphi 0, %s32
      %s26 = sphi 0, %s24
      %s27 = sphi 0, %s25
      %s28 = sphi 0, %s26
      %s29 = sphi 0, %s27
      %s41 = sphi 0, %s43
      %s44 = sphi 0, %s41
      %s45 = sphi 0, %s44
      %s61 = sphi 0, %s45
      %s69 = sphi 0, %s71
      %s72 = sphi 0, %s69
      %s73 = sphi 0, %s72
      %s89 = sphi 0, %s73
      %s95 = sphi 0, %s97
      %s98 = sphi 0, %s95
      %s99 = sphi 0, %s98
      %s115 = sphi 0, %s99
    $region4: #{tpu_custom_call.1} parent=1 // loop_header_branch
      %20 = sbr.rel (%p18) target = $region8
    $region5: #{tpu_custom_call.1} parent=1 // loop_body
      %s22 = ssub.s32 %s17, 1
      %s23 = ssub.s32 %s17, 2
      %s30 = sadd.s32 1, %s25
      %p31 = scmp.ge.s32.totalorder %s30, 1
      %s32 = scalar_select %p31, 0, %s30
      %s33 = sadd.s32 1, %s24
      %s34 = scalar_select %p31, %s33, %s24
      %p35 = scmp.ge.s32.totalorder %s34, 2
      %s36 = scalar_select %p35, 0, %s34
      %s37 = ssub.s32 %s24, %s36
      %s38 = ssub.s32 %s25, %s32
      %s39 = sor.u32 %s37, %s38
      %p40 = scmp.eq.s32.totalorder %s39, 0
      %s42 = sadd.s32 %s41, 1
      %s43 = scalar_select %p40, %s41, %s42
      %p46 = pneg %p40
      %p47 = scmp.eq.s32.totalorder %s17, 1
      %p48 = por %p46, %p47
      %p49 = scmp.ne.s32.totalorder %s41, %s44
      %p50 = scmp.eq.s32.totalorder %s17, 0
      %p51 = por %p49, %p50
      %p52 = scmp.ne.s32.totalorder %s41, %s44
      %p53 = scmp.eq.s32.totalorder %s22, 1
      %p54 = por %p52, %p53
      %p55 = scmp.ne.s32.totalorder %s44, %s45
      %p56 = scmp.eq.s32.totalorder %s22, 0
      %p57 = por %p55, %p56
      %p58 = scmp.ne.s32.totalorder %s44, %s45
      %p59 = scmp.eq.s32.totalorder %s23, 1
      %p60 = por %p58, %p59
      %p62 = scmp.ne.s32.totalorder %s45, %s61
      %p63 = scmp.eq.s32.totalorder %s23, 0
      %p64 = por %p62, %p63
      %s65 = ssub.s32 %s24, %s36
      %s66 = ssub.s32 %s25, %s32
      %s67 = sor.u32 %s65, %s66
      %p68 = scmp.eq.s32.totalorder %s67, 0
      %s70 = sadd.s32 %s69, 1
      %s71 = scalar_select %p68, %s69, %s70
      %p74 = pneg %p68
      %p75 = scmp.eq.s32.totalorder %s17, 1
      %p76 = por %p74, %p75
      %p77 = scmp.ne.s32.totalorder %s69, %s72
      %p78 = scmp.eq.s32.totalorder %s17, 0
      %p79 = por %p77, %p78
      %p80 = scmp.ne.s32.totalorder %s69, %s72
      %p81 = scmp.eq.s32.totalorder %s22, 1
      %p82 = por %p80, %p81
      %p83 = scmp.ne.s32.totalorder %s72, %s73
      %p84 = scmp.eq.s32.totalorder %s22, 0
      %p85 = por %p83, %p84
      %p86 = scmp.ne.s32.totalorder %s72, %s73
      %p87 = scmp.eq.s32.totalorder %s23, 1
      %p88 = por %p86, %p87
      %p90 = scmp.ne.s32.totalorder %s73, %s89
      %p91 = scmp.eq.s32.totalorder %s23, 0
      %p92 = por %p90, %p91
      %s93 = ssub.s32 %s24, %s36
      %p94 = scmp.eq.s32.totalorder %s93, 0
      %s96 = sadd.s32 %s95, 1
      %s97 = scalar_select %p94, %s95, %s96
      %p100 = pneg %p94
      %p101 = scmp.eq.s32.totalorder %s17, 1
      %p102 = por %p100, %p101
      %p103 = scmp.ne.s32.totalorder %s95, %s98
      %p104 = scmp.eq.s32.totalorder %s17, 0
      %p105 = por %p103, %p104
      %p106 = scmp.ne.s32.totalorder %s95, %s98
      %p107 = scmp.eq.s32.totalorder %s22, 1
      %p108 = por %p106, %p107
      %p109 = scmp.ne.s32.totalorder %s98, %s99
      %p110 = scmp.eq.s32.totalorder %s22, 0
      %p111 = por %p109, %p110
      %p112 = scmp.ne.s32.totalorder %s98, %s99
      %p113 = scmp.eq.s32.totalorder %s23, 1
      %p114 = por %p112, %p113
      %p116 = scmp.ne.s32.totalorder %s99, %s115
      %p117 = scmp.eq.s32.totalorder %s23, 0
      %p118 = por %p116, %p117
      %p119 = scmp.le.s32.totalorder 1, %s17
      %p120 = scmp.lt.s32.totalorder %s17, 3
      %p121 = pnand %p119, %p120
      %p122 = pneg %p121
      // Predicated region
      $region9: #{tpu_custom_call.1} parent=5 // pred_check
        _
      $region10: #{tpu_custom_call.1} parent=5 // pred_check_branch
        %124 = sbr.rel (%p121) target = $region12
      $region11: #{tpu_custom_call.1} parent=5 // pred_region
        %s125 = ssub.s32 %s17, 1
      $region12: #{tpu_custom_call.1} parent=5 // pred_fallthru
        _
      %p126 = scmp.lt.s32.totalorder %s17, 2
      // Predicated region
      $region13: #{tpu_custom_call.1} parent=5 // pred_check
        %p127 = pneg %p126
      $region14: #{tpu_custom_call.1} parent=5 // pred_check_branch
        %129 = sbr.rel (%p127) target = $region16
      $region15: #{tpu_custom_call.1} parent=5 // pred_region
        // Predicated region
        $region17: #{tpu_custom_call.1} parent=15 // pred_check
          %p130 = pneg %p51
        $region18: #{tpu_custom_call.1} parent=15 // pred_check_branch
          %132 = sbr.rel (%p130) target = $region20
        $region19: #{tpu_custom_call.1} parent=15 // pred_region
          %s133 = sand.u32 %s41, 1
          %s134 = scalar_lea.sflag [#allocation3], %s133
          %s135 = sand.u32 %s41, 1
          %s136 = smul.addr %s135, 32
          %s137 = scalar_lea.vmem [#allocation2], %s136
          %s139 = ssub.s32 512, 512
          %140 = vsyncadd %s134, %s139
          %s141 = smul.addr %s24, 4
          %s142 = sadd.s32 %s25, %s141
          %s143 = smul.addr %s142, 128
          %s144 = scalar_lea.hbm %s0, %s143
          %s145 = sshll.u32 %s137, 4
          %s146 = int_to_ptr.vmem [resolvable:$true] %s145
          %151 = dma.hbm_to_vmem [thread:$0]  %s144, 512, %s146, %s134, 128, 128, 8
        $region20: #{tpu_custom_call.1} parent=15 // pred_fallthru
          _
        // Predicated region
        $region21: #{tpu_custom_call.1} parent=15 // pred_check
          %p152 = pneg %p79
        $region22: #{tpu_custom_call.1} parent=15 // pred_check_branch
          %154 = sbr.rel (%p152) target = $region24
        $region23: #{tpu_custom_call.1} parent=15 // pred_region
          %s155 = sand.u32 %s69, 1
          %s156 = scalar_lea.sflag [#allocation6], %s155
          %s157 = sand.u32 %s69, 1
          %s158 = smul.addr %s157, 32
          %s159 = scalar_lea.vmem [#allocation5], %s158
          %s161 = ssub.s32 512, 512
          %162 = vsyncadd %s156, %s161
          %s163 = smul.addr %s24, 4
          %s164 = sadd.s32 %s25, %s163
          %s165 = smul.addr %s164, 128
          %s166 = scalar_lea.hbm %s1, %s165
          %s167 = sshll.u32 %s159, 4
          %s168 = int_to_ptr.vmem [resolvable:$true] %s167
          %173 = dma.hbm_to_vmem [thread:$0]  %s166, 512, %s168, %s156, 128, 128, 8
        $region24: #{tpu_custom_call.1} parent=15 // pred_fallthru
          _
      $region16: #{tpu_custom_call.1} parent=5 // pred_fallthru
        _
      %p174 = scmp.le.s32.totalorder 1, %s17
      %p175 = scmp.lt.s32.totalorder %s17, 3
      %p176 = pnand %p174, %p175
      %p177 = pneg %p176
      // Predicated region
      $region25: #{tpu_custom_call.1} parent=5 // pred_check
        _
      $region26: #{tpu_custom_call.1} parent=5 // pred_check_branch
        %179 = sbr.rel (%p176) target = $region28
      $region27: #{tpu_custom_call.1} parent=5 // pred_region
        %s180 = ssub.s32 %s17, 1
        %s181 = sand.u32 %s44, 1
        %s182 = scalar_lea.sflag [#allocation3], %s181
        %s183 = sand.u32 %s44, 1
        %s184 = smul.addr %s183, 32
        %s185 = scalar_lea.vmem [#allocation2], %s184
        // Predicated region
        $region29: #{tpu_custom_call.1} parent=27 // pred_check
          %p186 = pneg %p57
        $region30: #{tpu_custom_call.1} parent=27 // pred_check_branch
          %188 = sbr.rel (%p186) target = $region32
        $region31: #{tpu_custom_call.1} parent=27 // pred_region
          %189 = dma.done %s182, 512
        $region32: #{tpu_custom_call.1} parent=27 // pred_fallthru
          _
        %s190 = sand.u32 %s72, 1
        %s191 = scalar_lea.sflag [#allocation6], %s190
        %s192 = sand.u32 %s72, 1
        %s193 = smul.addr %s192, 32
        %s194 = scalar_lea.vmem [#allocation5], %s193
        // Predicated region
        $region33: #{tpu_custom_call.1} parent=27 // pred_check
          %p195 = pneg %p85
        $region34: #{tpu_custom_call.1} parent=27 // pred_check_branch
          %197 = sbr.rel (%p195) target = $region36
        $region35: #{tpu_custom_call.1} parent=27 // pred_region
          %198 = dma.done %s191, 512
        $region36: #{tpu_custom_call.1} parent=27 // pred_fallthru
          _
        %s199 = sand.u32 %s44, 1
        %s200 = scalar_lea.sflag [#allocation3], %s199
        %s201 = sand.u32 %s44, 1
        %s202 = smul.addr %s201, 32
        %s203 = scalar_lea.vmem [#allocation2], %s202
        %p204 = pneg %p57
        %p205 = pneg %p54
        %s206 = sand.u32 %s72, 1
        %s207 = scalar_lea.sflag [#allocation6], %s206
        %s208 = sand.u32 %s72, 1
        %s209 = smul.addr %s208, 32
        %s210 = scalar_lea.vmem [#allocation5], %s209
        %p211 = pneg %p85
        %p212 = pneg %p82
        %p213 = pneg %p111
        %p214 = pneg %p108
        %s215 = sand.u32 %s98, 1
        %s216 = scalar_lea.sflag [#allocation4], %s215
        %s217 = sand.u32 %s98, 1
        %s218 = smul.addr %s217, 12
        %s219 = scalar_lea.vmem [#allocation7], %s218
        %p220 = scmp.eq.s32.totalorder %s27, 0
        // Predicated region
        $region37: #{tpu_custom_call.1} parent=27 // pred_check
          %p221 = pneg %p220
        $region38: #{tpu_custom_call.1} parent=27 // pred_check_branch
          %223 = sbr.rel (%p221) target = $region40
        $region39: #{tpu_custom_call.1} parent=27 // pred_region
          %224 = vst [vmem:[%s219] sm:$0xf] 0.0
          %225 = vst [vmem:[%s219 + $0x4] sm:$0xf] 0.0
          %226 = vst [vmem:[%s219 + $0x8] sm:$0xf] 0.0
        $region40: #{tpu_custom_call.1} parent=27 // pred_fallthru
          _
        %v227 = vld [vmem:[%s185] sm:$0xff]
        %v228 = vld [vmem:[%s185 + $0x8] sm:$0xff]
        %v229 = vld [vmem:[%s185 + $0x10] sm:$0xff]
        %v230 = vld [vmem:[%s185 + $0x18] sm:$0xff]
        %v231 = vld [vmem:[%s194] sm:$0xff]
        %v232 = vld [vmem:[%s194 + $0x8] sm:$0xff]
        %v233 = vld [vmem:[%s194 + $0x10] sm:$0xff]
        %v234 = vld [vmem:[%s194 + $0x18] sm:$0xff]
        %v235 = vmax.f32 %v227, %v228
        %v236 = vmax.f32 %v229, %v230
        %v237 = vmax.f32 %v235, %v236
        %v238 = vsub.f32 %v227, %v237
        %v239 = vsub.f32 %v228, %v237
        %v240 = vsub.f32 %v229, %v237
        %v241 = vsub.f32 %v230, %v237
        %v242 = vmul.f32 %v238, 1.442695
        %v243 = vpow.pop %v242
        %v244 = vmul.f32 %v239, 1.442695
        %v245 = vpow.pop %v244
        %v246 = vmul.f32 %v240, 1.442695
        %v247 = vpow.pop %v246
        %v248 = vmul.f32 %v241, 1.442695
        %v249 = vpow.pop %v248
        %v250 = vadd.f32 %v243, %v245
        %v251 = vadd.f32 %v250, %v247
        %v252 = vadd.f32 %v251, %v249
        %v253 = vrcp.pop %v252
        %v254 = vmul.f32 %v243, %v253
        %v255 = vmul.f32 %v245, %v253
        %v256 = vmul.f32 %v247, %v253
        %v257 = vmul.f32 %v249, %v253
        %v258 = vld [vmem:[%s219] sm:$0xf]
        %v259 = vmul.f32 %v254, %v231
        %v260 = vmul.f32 %v255, %v232
        %v261 = vmul.f32 %v256, %v233
        %v262 = vmul.f32 %v257, %v234
        %v263 = vrot.slane %v259, 4
        %v264 = vadd.f32 %v259, %v263
        %v265 = vrot.slane %v264, 2
        %v266 = vadd.f32 %v264, %v265
        %v267 = vrot.slane %v266, 1
        %v268 = vadd.f32 %v266, %v267
        %v269 = vrot.slane %v260, 4
        %v270 = vadd.f32 %v260, %v269
        %v271 = vrot.slane %v270, 2
        %v272 = vadd.f32 %v270, %v271
        %v273 = vrot.slane %v272, 1
        %v274 = vadd.f32 %v272, %v273
        %v275 = vrot.slane %v261, 4
        %v276 = vadd.f32 %v261, %v275
        %v277 = vrot.slane %v276, 2
        %v278 = vadd.f32 %v276, %v277
        %v279 = vrot.slane %v278, 1
        %v280 = vadd.f32 %v278, %v279
        %v281 = vrot.slane %v262, 4
        %v282 = vadd.f32 %v262, %v281
        %v283 = vrot.slane %v282, 2
        %v284 = vadd.f32 %v282, %v283
        %v285 = vrot.slane %v284, 1
        %v286 = vadd.f32 %v284, %v285
        %vm291 = vcmask 1041409
        %v292 = vsel %vm291, %v274, %v268
        %vm293 = vcmask 1042434
        %v294 = vsel %vm293, %v280, %v292
        %vm295 = vcmask 1043459
        %v296 = vsel %vm295, %v286, %v294
        %v298 = vadd.f32 %v258, %v296
        %299 = vst [vmem:[%s219] sm:$0xf] %v298
        %s300 = scalar_lea.vmem %s219, 4 [#allocation7]
        %v301 = vld [vmem:[%s300] sm:$0xf]
        %v302 = vmul.f32 %v254, %v254
        %v303 = vmul.f32 %v255, %v255
        %v304 = vmul.f32 %v256, %v256
        %v305 = vmul.f32 %v257, %v257
        %v306 = vrot.slane %v302, 4
        %v307 = vadd.f32 %v302, %v306
        %v308 = vrot.slane %v307, 2
        %v309 = vadd.f32 %v307, %v308
        %v310 = vrot.slane %v309, 1
        %v311 = vadd.f32 %v309, %v310
        %v312 = vrot.slane %v303, 4
        %v313 = vadd.f32 %v303, %v312
        %v314 = vrot.slane %v313, 2
        %v315 = vadd.f32 %v313, %v314
        %v316 = vrot.slane %v315, 1
        %v317 = vadd.f32 %v315, %v316
        %v318 = vrot.slane %v304, 4
        %v319 = vadd.f32 %v304, %v318
        %v320 = vrot.slane %v319, 2
        %v321 = vadd.f32 %v319, %v320
        %v322 = vrot.slane %v321, 1
        %v323 = vadd.f32 %v321, %v322
        %v324 = vrot.slane %v305, 4
        %v325 = vadd.f32 %v305, %v324
        %v326 = vrot.slane %v325, 2
        %v327 = vadd.f32 %v325, %v326
        %v328 = vrot.slane %v327, 1
        %v329 = vadd.f32 %v327, %v328
        %v334 = vsel %vm291, %v317, %v311
        %v335 = vsel %vm293, %v323, %v334
        %v336 = vsel %vm295, %v329, %v335
        %v338 = vadd.f32 %v301, %v336
        %339 = vst [vmem:[%s300] sm:$0xf] %v338
        %s340 = scalar_lea.vmem %s219, 8 [#allocation7]
        %v341 = vld [vmem:[%s340] sm:$0xf]
        %v342 = vmul.f32 %v231, %v231
        %v343 = vmul.f32 %v232, %v232
        %v344 = vmul.f32 %v233, %v233
        %v345 = vmul.f32 %v234, %v234
        %v346 = vrot.slane %v342, 4
        %v347 = vadd.f32 %v342, %v346
        %v348 = vrot.slane %v347, 2
        %v349 = vadd.f32 %v347, %v348
        %v350 = vrot.slane %v349, 1
        %v351 = vadd.f32 %v349, %v350
        %v352 = vrot.slane %v343, 4
        %v353 = vadd.f32 %v343, %v352
        %v354 = vrot.slane %v353, 2
        %v355 = vadd.f32 %v353, %v354
        %v356 = vrot.slane %v355, 1
        %v357 = vadd.f32 %v355, %v356
        %v358 = vrot.slane %v344, 4
        %v359 = vadd.f32 %v344, %v358
        %v360 = vrot.slane %v359, 2
        %v361 = vadd.f32 %v359, %v360
        %v362 = vrot.slane %v361, 1
        %v363 = vadd.f32 %v361, %v362
        %v364 = vrot.slane %v345, 4
        %v365 = vadd.f32 %v345, %v364
        %v366 = vrot.slane %v365, 2
        %v367 = vadd.f32 %v365, %v366
        %v368 = vrot.slane %v367, 1
        %v369 = vadd.f32 %v367, %v368
        %v374 = vsel %vm291, %v357, %v351
        %v375 = vsel %vm293, %v363, %v374
        %v376 = vsel %vm295, %v369, %v375
        %v378 = vadd.f32 %v341, %v376
        %379 = vst [vmem:[%s340] sm:$0xf] %v378
        %s380 = sand.u32 %s98, 1
        %s381 = scalar_lea.sflag [#allocation4], %s380
        %s382 = sand.u32 %s98, 1
        %s383 = smul.addr %s382, 12
        %s384 = scalar_lea.vmem [#allocation7], %s383
        // Predicated region
        $region41: #{tpu_custom_call.1} parent=27 // pred_check
          %p385 = pneg %p108
        $region42: #{tpu_custom_call.1} parent=27 // pred_check_branch
          %387 = sbr.rel (%p385) target = $region44
        $region43: #{tpu_custom_call.1} parent=27 // pred_region
          %s389 = ssub.s32 192, 192
          %390 = vsyncadd %s381, %s389
          %s391 = smul.addr %s26, 3
          %s392 = smul.addr %s391, 64
          %s393 = scalar_lea.hbm %s2, %s392
          %s394 = sshll.u32 %s384, 4
          %s395 = int_to_ptr.vmem [resolvable:$true] %s394
          %400 = dma.vmem_to_hbm [thread:$0]  %s395, 192, %s393, %s381, 64, 64, 4
        $region44: #{tpu_custom_call.1} parent=27 // pred_fallthru
          _
      $region28: #{tpu_custom_call.1} parent=5 // pred_fallthru
        _
      %p401 = scmp.le.s32.totalorder 2, %s17
      // Predicated region
      $region45: #{tpu_custom_call.1} parent=5 // pred_check
        %p402 = pneg %p401
      $region46: #{tpu_custom_call.1} parent=5 // pred_check_branch
        %404 = sbr.rel (%p402) target = $region48
      $region47: #{tpu_custom_call.1} parent=5 // pred_region
        %s405 = ssub.s32 %s17, 2
        // Predicated region
        $region49: #{tpu_custom_call.1} parent=47 // pred_check
          %p406 = pneg %p114
        $region50: #{tpu_custom_call.1} parent=47 // pred_check_branch
          %408 = sbr.rel (%p406) target = $region52
        $region51: #{tpu_custom_call.1} parent=47 // pred_region
          %s409 = sand.u32 %s99, 1
          %s410 = scalar_lea.sflag [#allocation4], %s409
          %s411 = sand.u32 %s99, 1
          %s412 = smul.addr %s411, 12
          %s413 = scalar_lea.vmem [#allocation7], %s412
          %414 = dma.done %s410, 192
        $region52: #{tpu_custom_call.1} parent=47 // pred_fallthru
          _
      $region48: #{tpu_custom_call.1} parent=5 // pred_fallthru
        _
    $region6: #{tpu_custom_call.1} parent=1 // loop_footer
      %s21 = sadd.s32 1, %s17
    $region7: #{tpu_custom_call.1} parent=1 // loop_footer_branch
      %16 = sbr.rel target = $region3
    $region8: #{tpu_custom_call.1} parent=1 // loop_exit
      _
    %415 = vsyncpa [#allocation3], 1
    %s416 = scalar_lea.sflag [#allocation3], 1
    %417 = vsyncpa %s416, 1
    %418 = vsyncpa [#allocation6], 1
    %s419 = scalar_lea.sflag [#allocation6], 1
    %420 = vsyncpa %s419, 1
    %421 = vsyncpa [#allocation4], 1
    %s422 = scalar_lea.sflag [#allocation4], 1
    %423 = vsyncpa %s422, 1

</llo_original>
